<compile_context>
chip_gen: v7x
topology: tpu7x:2x2x1
jax: 0.10.0
libtpu: 0.0.40
codegen_flags: <defaults>
</compile_context>

<pallas_src>
import numpy as np
import jax
import jax.numpy as jnp
from jax.experimental import pallas as pl
from jax.experimental.pallas import tpu as pltpu


# ----------------------------------------------------------------------------
# Division-tree construction (host-side numpy, made deterministic).
# ----------------------------------------------------------------------------
def _2div(arr):
    arr_res = arr.copy()
    arr_pieces = []
    pa = 0
    st = 0
    needdivcnt = 0
    for i, a in enumerate(arr):
        if a != pa:
            arr_pieces.append([st, i])
            if i - st != 1:
                needdivcnt += 1
            pa = a
            st = i
    arr_pieces.append([st, len(arr)])
    if len(arr) - st != 1:
        needdivcnt += 1
    offset = range(len(arr_pieces), len(arr_pieces) + needdivcnt)
    p = 0
    for arr_p in arr_pieces:
        length = arr_p[1] - arr_p[0]
        if length == 1:
            continue
        half_len = int(np.ceil(length / 2))
        for j in range(arr_p[0] + half_len, arr_p[1]):
            arr_res[j] = offset[p]
        p += 1
    return arr_res


def get_division_tree(n_agents, rng):
    agent2divitreeindex = np.arange(n_agents)
    rng.shuffle(agent2divitreeindex)   # deterministic RandomState, not np.random
    max_div = np.ceil(np.log2(n_agents)).astype(int)
    levels = np.zeros(shape=(max_div + 1, n_agents), dtype=int)
    for ith in range(len(levels)):
        if ith == 0:
            continue
        levels[ith, :] = _2div(levels[ith - 1, :])
    res_levels = levels.copy()
    for i, div_tree_index in enumerate(agent2divitreeindex):
        res_levels[:, i] = levels[:, div_tree_index]
    return res_levels


def _round_up(x, m):
    return (x + m - 1) // m * m


# ----------------------------------------------------------------------------
# Pallas kernel: per-slot 2-layer MLP (Linear -> ReLU -> Linear).
# Scalar-prefetch refs (net_sorted, agent_flat) are consumed by the
# index_maps; the body only sees already-selected 2-D tiles plus the small
# VMEM-resident bias tables.
# ----------------------------------------------------------------------------
def _slot_mlp_kernel(net_ref, agent_ref, x_ref, w1_ref, w2_ref, b1_ref, b2_ref,
                     o_ref):
    # x_ref : (B, H) f32      w1_ref: (H, H)          w2_ref: (H, Cpad)
    # b1_ref: (A, 1, H) f32   b2_ref: (A, 1, Cpad)    o_ref : (B, Cpad)
    del net_ref, agent_ref                 # consumed by the index_maps
    a = pl.program_id(0)                   # net-sorted slot position
    w1 = w1_ref[...]
    h = jnp.dot(x_ref[...].astype(w1.dtype), w1,
                preferred_element_type=jnp.float32) + b1_ref[a]
    h = jnp.maximum(h, 0.0)                # bias add / ReLU kept in f32 (v5e)
    w2 = w2_ref[...]
    y = jnp.dot(h.astype(w2.dtype), w2,
                preferred_element_type=jnp.float32) + b2_ref[a]
    o_ref[...] = y.astype(o_ref.dtype)


def _run_slot_nets(x_aT, tables, agent_flat, n_phases):
    """x_aT: (A, B, H) agent-major input.  Returns (n_phases, A, B, Cpad).

    For grid point (a, p): slot i = order[a] reads input agent
    agent_flat[p*A + a], runs net net_sorted[a] with slot i's effective bias,
    and writes output agent agent_flat[p*A + a] of phase p.  Because the
    weight index_maps depend only on net_sorted[a], consecutive same-net
    steps (and both phases of one slot) revisit the weight blocks with no
    re-DMA.
    """
    A, B, H = x_aT.shape
    _, _, Cpad = tables["W2_t"].shape

    return pl.pallas_call(
        _slot_mlp_kernel,
        out_shape=jax.ShapeDtypeStruct((n_phases, A, B, Cpad), x_aT.dtype),
        grid_spec=pltpu.PrefetchScalarGridSpec(
            num_scalar_prefetch=2,          # net_sorted, agent_flat -> SMEM
            grid=(A, n_phases),             # phase innermost -> weight reuse
            in_specs=[
                # input agent for (slot a, phase p)
                pl.BlockSpec((None, B, H),
                             lambda a, p, net, ag: (ag[p * A + a], 0, 0)),
                # weights selected per net; index independent of the phase and
                # constant across same-net (sorted) slots -> re-DMA skipped
                pl.BlockSpec((None, H, H),
                             lambda a, p, net, ag: (net[a], 0, 0)),
                pl.BlockSpec((None, H, Cpad),
                             lambda a, p, net, ag: (net[a], 0, 0)),
                # per-slot biases: whole arrays, constant index -> DMA'd once,
                # row-selected inside the kernel with program_id
                pl.BlockSpec((A, 1, H), lambda a, p, net, ag: (0, 0, 0)),
                pl.BlockSpec((A, 1, Cpad), lambda a, p, net, ag: (0, 0, 0)),
            ],
            # output agent = input agent (bijective per phase -> no races)
            out_specs=pl.BlockSpec(
                (None, None, B, Cpad),
                lambda a, p, net, ag: (p, ag[p * A + a], 0, 0)),
        ),
        compiler_params=pltpu.CompilerParams(
            dimension_semantics=("parallel", "arbitrary"),
            vmem_limit_bytes=32 * 1024 * 1024),
    )(tables["net_sorted"], agent_flat, x_aT,
      tables["W1x_t"], tables["W2_t"], tables["b1s"], tables["b2s"])


# ----------------------------------------------------------------------------
# One-time weight re-layout, done when the div-tree level changes (rare),
# never per forward call.  nn.Linear stores W as (out, in); W1 is split into
# its x part and one-hot part, the latter folded into a per-slot bias.
# W2/b2 are zero-padded on the action dim to a lane-dense multiple of 128.
# Slots are pre-sorted by net index so same-net slots are adjacent in the
# grid (weight-block revisiting).
# ----------------------------------------------------------------------------
def prepare_level_tables(params, h_dim, net_index, *, weights_dtype=jnp.float32):
    W1 = np.asarray(params["W1"], dtype=np.float32)        # (n_nets, H, H+A)
    b1 = np.asarray(params["b1"], dtype=np.float32)        # (n_nets, H)
    W2 = np.asarray(params["W2"], dtype=np.float32)        # (n_nets, C, H)
    b2 = np.asarray(params["b2"], dtype=np.float32)        # (n_nets, C)
    n_nets, H, _ = W1.shape
    A = W1.shape[2] - h_dim
    C = W2.shape[1]
    Cpad = max(128, _round_up(C, 128))

    net_index = np.asarray(net_index, dtype=np.int32)               # (A,)
    order = np.argsort(net_index, kind="stable").astype(np.int32)   # (A,)
    net_sorted = net_index[order]                                   # (A,)

    # effective first bias for sorted slot a (slot i = order[a], net n):
    #   b1[n] + W1[n, :, H + i]   (the one-hot column folded in)
    b1s = b1[net_sorted] + W1[net_sorted, :, h_dim + order]         # (A, H)

    W2_t = np.zeros((n_nets, H, Cpad), dtype=np.float32)
    W2_t[:, :, :C] = np.transpose(W2, (0, 2, 1))
    b2s = np.zeros((A, 1, Cpad), dtype=np.float32)
    b2s[:, 0, :C] = b2[net_sorted]

    return {
        "order": jnp.asarray(order),                                # (A,) int32
        "net_sorted": jnp.asarray(net_sorted),                      # (A,) int32
        "W1x_t": jnp.asarray(np.transpose(W1[:, :, :h_dim], (0, 2, 1)),
                             dtype=weights_dtype),                  # (n, H, H)
        "W2_t": jnp.asarray(W2_t, dtype=weights_dtype),             # (n, H, Cpad)
        "b1s": jnp.asarray(b1s[:, None, :], dtype=jnp.float32),     # (A, 1, H)
        "b2s": jnp.asarray(b2s, dtype=jnp.float32),                 # (A, 1, Cpad)
        "n_action": C,
    }


def div_tree_forward(x_in, tables, req_confact_info=False, key=None):
    """Pallas equivalent of DivTree.forward(x_in, req_confact_info)."""
    B, A, H = x_in.shape
    C = tables["n_action"]
    order = tables["order"]

    # NOTE: keep the surrounding model agent-major to drop these transposes.
    x_aT = jnp.transpose(x_in, (1, 0, 2))                           # (A, B, H)

    if req_confact_info:
        # jax.random.permutation guarantees a bijection; any duplicate agent
        # index here would be a silent write race under the "parallel" axis.
        perm_index = jax.random.permutation(key, A).astype(jnp.int32)
        agent_flat = jnp.concatenate([order, perm_index[order]])    # (2A,)
        n_phases = 2
    else:
        perm_index = None
        agent_flat = order
        n_phases = 1

    out = _run_slot_nets(x_aT, tables, agent_flat, n_phases)  # (P, A, B, Cpad)
    out = jnp.transpose(out[..., :C], (0, 2, 1, 3))           # (P, B, A, C)

    x2 = out[0]
    if not req_confact_info:
        return x2, None
    confact_info = {"orig_out": x2, "confact_out": out[1],
                    "perm_index": perm_index}
    return x2, confact_info


# ----------------------------------------------------------------------------
# Deterministic parameter init (nn.Linear shapes: W (out, in), b (out,))
# ----------------------------------------------------------------------------
def init_params(key, n_agent, h_dim, n_action, in_dim):
    k1, k2, k3, _ = jax.random.split(key, 4)
    s1 = 1.0 / np.sqrt(in_dim)
    s2 = 0.01  # LinearFinal: small-gain init
    return {
        "W1": jax.random.uniform(k1, (n_agent, h_dim, in_dim), jnp.float32, -s1, s1),
        "b1": jax.random.uniform(k2, (n_agent, h_dim), jnp.float32, -s1, s1),
        "W2": jax.random.uniform(k3, (n_agent, n_action, h_dim), jnp.float32, -s2, s2),
        "b2": jnp.zeros((n_agent, n_action), jnp.float32),
    }


# ----------------------------------------------------------------------------
# Plain-JAX references for the correctness check.
# ----------------------------------------------------------------------------
def _reference_forward(x_in, params, net_index):
    B, A, H = x_in.shape
    onehot = jnp.eye(A, dtype=x_in.dtype)
    x0 = jnp.concatenate([x_in, jnp.broadcast_to(onehot, (B, A, A))], axis=-1)
    outs = []
    for i in range(A):
        n = int(net_index[i])
        h = jnp.maximum(x0[:, i, :] @ params["W1"][n].T + params["b1"][n], 0.0)
        outs.append(h @ params["W2"][n].T + params["b2"][n])
    return jnp.stack(outs, axis=-2)


def _reference_confact(x_in, params, net_index, perm_index):
    perm_x_in = x_in[:, perm_index, :]
    perm_x2 = _reference_forward(perm_x_in, params, net_index)
    out = jnp.full_like(perm_x2, jnp.nan)
    return out.at[:, perm_index, :].set(perm_x2)


if __name__ == "__main__":
    B, A, H, C = 8, 4, 32, 8            # batch, n_agent, h_dim, n_action
    D = H + A

    key = jax.random.PRNGKey(0)
    kx, kp, kperm = jax.random.split(key, 3)

    x_in = jax.random.normal(kx, (B, A, H), jnp.float32)
    params = init_params(kp, A, H, C, D)

    div_tree = get_division_tree(A, np.random.RandomState(0))
    current_level = 1                   # level 0 -> all share net 0
    net_index_np = div_tree[current_level]

    # ---- f32 weight tables (bit-exact vs. reference) ------------------------
    tables = prepare_level_tables(params, H, net_index_np)     # at level change
    x2, confact_info = div_tree_forward(
        x_in, tables, req_confact_info=True, key=kperm)
    jax.block_until_ready(x2)
    jax.block_until_ready(confact_info["confact_out"])

    ref = _reference_forward(x_in, params, net_index_np)
    assert x2.shape == (B, A, C)
    np.testing.assert_allclose(np.asarray(x2), np.asarray(ref),
                               rtol=1e-5, atol=1e-5)

    perm_np = np.asarray(confact_info["perm_index"])
    ref_conf = _reference_confact(x_in, params, net_index_np, perm_np)
    np.testing.assert_allclose(np.asarray(confact_info["confact_out"]),
                               np.asarray(ref_conf), rtol=1e-5, atol=1e-5)
    assert not np.isnan(np.asarray(confact_info["confact_out"])).any()

    # ---- bf16 weight tables (v6e/v7x MXU path), f32 accumulate --------------
    tables_bf16 = prepare_level_tables(params, H, net_index_np,
                                       weights_dtype=jnp.bfloat16)
    x2_bf16, _ = div_tree_forward(x_in, tables_bf16, req_confact_info=False)
    jax.block_until_ready(x2_bf16)
    np.testing.assert_allclose(np.asarray(x2_bf16), np.asarray(ref),
                               rtol=5e-2, atol=5e-3)

    print("KERNEL_OK")
</pallas_src>

<mosaic_0001>
module attributes {stable_mosaic.version = 11 : i64} {
  func.func @_slot_mlp_kernel(%arg0: i32, %arg1: i32, %arg2: memref<4xi32, #tpu.memory_space<smem>>, %arg3: memref<8xi32, #tpu.memory_space<smem>>, %arg4: memref<1x8x32xf32, #tpu.memory_space<vmem>>, %arg5: memref<1x32x32xf32, #tpu.memory_space<vmem>>, %arg6: memref<1x32x128xf32, #tpu.memory_space<vmem>>, %arg7: memref<4x1x32xf32, #tpu.memory_space<vmem>>, %arg8: memref<4x1x128xf32, #tpu.memory_space<vmem>>, %arg9: memref<1x1x8x128xf32, #tpu.memory_space<vmem>>) attributes {dimension_semantics = [#tpu.dimension_semantics<parallel>, #tpu.dimension_semantics<arbitrary>], iteration_bounds = array<i64: 4, 2>, scalar_prefetch = 2 : i64, scratch_operands = 0 : i64, tpu.core_type = #tpu.core_type<tc>, window_params = [{transform_indices = @transform_0, window_bounds = array<i64: 1, 8, 32>}, {transform_indices = @transform_1, window_bounds = array<i64: 1, 32, 32>}, {transform_indices = @transform_2, window_bounds = array<i64: 1, 32, 128>}, {pipeline_mode = #tpu.pipeline_mode<synchronous>, transform_indices = @transform_3, window_bounds = array<i64: 4, 1, 32>}, {pipeline_mode = #tpu.pipeline_mode<synchronous>, transform_indices = @transform_4, window_bounds = array<i64: 4, 1, 128>}, {transform_indices = @transform_5, window_bounds = array<i64: 1, 1, 8, 128>}]} {
    %c0 = arith.constant 0 : index
    %c0_0 = arith.constant 0 : index
    %c0_1 = arith.constant 0 : index
    %0 = vector.load %arg5[%c0, %c0_0, %c0_1] : memref<1x32x32xf32, #tpu.memory_space<vmem>>, vector<1x32x32xf32>
    %1 = vector.shape_cast %0 : vector<1x32x32xf32> to vector<32x32xf32>
    %c0_2 = arith.constant 0 : index
    %c0_3 = arith.constant 0 : index
    %c0_4 = arith.constant 0 : index
    %2 = vector.load %arg4[%c0_2, %c0_3, %c0_4] : memref<1x8x32xf32, #tpu.memory_space<vmem>>, vector<1x8x32xf32>
    %3 = vector.shape_cast %2 : vector<1x8x32xf32> to vector<8x32xf32>
    %cst = arith.constant dense<0.000000e+00> : vector<8x32xf32>
    %4 = tpu.matmul %3, %1, %cst {dimension_numbers = #tpu.dot_dimension_numbers<[1], [0], [0], [1], [0, 0, 1, 1], [], []>} : vector<8x32xf32>, vector<32x32xf32>, vector<8x32xf32> -> vector<8x32xf32>
    %5 = arith.index_cast %arg0 : i32 to index
    %c0_5 = arith.constant 0 : index
    %c0_6 = arith.constant 0 : index
    %6 = vector.load %arg7[%5, %c0_5, %c0_6] : memref<4x1x32xf32, #tpu.memory_space<vmem>>, vector<1x1x32xf32>
    %7 = vector.shape_cast %6 : vector<1x1x32xf32> to vector<1x32xf32>
    %8 = vector.broadcast %7 : vector<1x32xf32> to vector<8x32xf32>
    %9 = arith.addf %4, %8 : vector<8x32xf32>
    %cst_7 = arith.constant 0.000000e+00 : f32
    %10 = vector.broadcast %cst_7 : f32 to vector<8x32xf32>
    %11 = arith.maximumf %9, %10 : vector<8x32xf32>
    %c0_8 = arith.constant 0 : index
    %c0_9 = arith.constant 0 : index
    %c0_10 = arith.constant 0 : index
    %12 = vector.load %arg6[%c0_8, %c0_9, %c0_10] : memref<1x32x128xf32, #tpu.memory_space<vmem>>, vector<1x32x128xf32>
    %13 = vector.shape_cast %12 : vector<1x32x128xf32> to vector<32x128xf32>
    %cst_11 = arith.constant dense<0.000000e+00> : vector<8x128xf32>
    %14 = tpu.matmul %11, %13, %cst_11 {dimension_numbers = #tpu.dot_dimension_numbers<[1], [0], [0], [1], [0, 0, 1, 1], [], []>} : vector<8x32xf32>, vector<32x128xf32>, vector<8x128xf32> -> vector<8x128xf32>
    %15 = arith.index_cast %arg0 : i32 to index
    %c0_12 = arith.constant 0 : index
    %c0_13 = arith.constant 0 : index
    %16 = vector.load %arg8[%15, %c0_12, %c0_13] : memref<4x1x128xf32, #tpu.memory_space<vmem>>, vector<1x1x128xf32>
    %17 = vector.shape_cast %16 : vector<1x1x128xf32> to vector<1x128xf32>
    %18 = vector.broadcast %17 : vector<1x128xf32> to vector<8x128xf32>
    %19 = arith.addf %14, %18 : vector<8x128xf32>
    %c0_14 = arith.constant 0 : index
    %c0_15 = arith.constant 0 : index
    %c0_16 = arith.constant 0 : index
    %c0_17 = arith.constant 0 : index
    %20 = vector.load %arg9[%c0_14, %c0_15, %c0_16, %c0_17] : memref<1x1x8x128xf32, #tpu.memory_space<vmem>>, vector<1x1x8x128xf32>
    %21 = vector.shape_cast %20 : vector<1x1x8x128xf32> to vector<8x128xf32>
    %22 = vector.shape_cast %19 : vector<8x128xf32> to vector<1x1x8x128xf32>
    tpu.vector_store %arg9[%c0_14, %c0_15, %c0_16, %c0_17], %22 {strides = array<i32>} : memref<1x1x8x128xf32, #tpu.memory_space<vmem>>, vector<1x1x8x128xf32>,
    return
  }
  func.func @transform_0(%arg0: i32, %arg1: i32, %arg2: memref<4xi32, #tpu.memory_space<smem>>, %arg3: memref<8xi32, #tpu.memory_space<smem>>) -> (i32, i32, i32) {
    %c4_i32 = arith.constant 4 : i32
    %0 = arith.muli %arg1, %c4_i32 : i32
    %1 = arith.addi %0, %arg0 : i32
    %2 = arith.index_cast %1 : i32 to index
    %3 = memref.load %arg3[%2] : memref<8xi32, #tpu.memory_space<smem>>
    %c0_i32 = arith.constant 0 : i32
    %c0_i32_0 = arith.constant 0 : i32
    %c0_i32_1 = arith.constant 0 : i32
    return %3, %c0_i32, %c0_i32_0 : i32, i32, i32
  }
  func.func @transform_1(%arg0: i32, %arg1: i32, %arg2: memref<4xi32, #tpu.memory_space<smem>>, %arg3: memref<8xi32, #tpu.memory_space<smem>>) -> (i32, i32, i32) {
    %0 = arith.index_cast %arg0 : i32 to index
    %1 = memref.load %arg2[%0] : memref<4xi32, #tpu.memory_space<smem>>
    %c0_i32 = arith.constant 0 : i32
    %c0_i32_0 = arith.constant 0 : i32
    %c0_i32_1 = arith.constant 0 : i32
    return %1, %c0_i32, %c0_i32_0 : i32, i32, i32
  }
  func.func @transform_2(%arg0: i32, %arg1: i32, %arg2: memref<4xi32, #tpu.memory_space<smem>>, %arg3: memref<8xi32, #tpu.memory_space<smem>>) -> (i32, i32, i32) {
    %0 = arith.index_cast %arg0 : i32 to index
    %1 = memref.load %arg2[%0] : memref<4xi32, #tpu.memory_space<smem>>
    %c0_i32 = arith.constant 0 : i32
    %c0_i32_0 = arith.constant 0 : i32
    %c0_i32_1 = arith.constant 0 : i32
    return %1, %c0_i32, %c0_i32_0 : i32, i32, i32
  }
  func.func @transform_3(%arg0: i32, %arg1: i32, %arg2: memref<4xi32, #tpu.memory_space<smem>>, %arg3: memref<8xi32, #tpu.memory_space<smem>>) -> (i32, i32, i32) {
    %c0_i32 = arith.constant 0 : i32
    %c0_i32_0 = arith.constant 0 : i32
    %c0_i32_1 = arith.constant 0 : i32
    %c0_i32_2 = arith.constant 0 : i32
    return %c0_i32, %c0_i32_0, %c0_i32_1 : i32, i32, i32
  }
  func.func @transform_4(%arg0: i32, %arg1: i32, %arg2: memref<4xi32, #tpu.memory_space<smem>>, %arg3: memref<8xi32, #tpu.memory_space<smem>>) -> (i32, i32, i32) {
    %c0_i32 = arith.constant 0 : i32
    %c0_i32_0 = arith.constant 0 : i32
    %c0_i32_1 = arith.constant 0 : i32
    %c0_i32_2 = arith.constant 0 : i32
    return %c0_i32, %c0_i32_0, %c0_i32_1 : i32, i32, i32
  }
  func.func @transform_5(%arg0: i32, %arg1: i32, %arg2: memref<4xi32, #tpu.memory_space<smem>>, %arg3: memref<8xi32, #tpu.memory_space<smem>>) -> (i32, i32, i32, i32) {
    %c4_i32 = arith.constant 4 : i32
    %0 = arith.muli %arg1, %c4_i32 : i32
    %1 = arith.addi %0, %arg0 : i32
    %2 = arith.index_cast %1 : i32 to index
    %3 = memref.load %arg3[%2] : memref<8xi32, #tpu.memory_space<smem>>
    %c0_i32 = arith.constant 0 : i32
    %c0_i32_0 = arith.constant 0 : i32
    %c0_i32_1 = arith.constant 0 : i32
    return %arg1, %3, %c0_i32, %c0_i32_0 : i32, i32, i32, i32
  }
}

</mosaic_0001>

<llo_original>
// kernel: tpu_custom_call.1
$region0: #{tpu_custom_call.1}
  #allocation0 [shape = 'u32[]', space=smem, size = 0x4, offset = 0x4, fixed_abs, tag = 'smem constant byte address 0x4 - core index']
  #allocation1 [shape = 'u32[144,128]{1,0:T(1,128)}', space=vmem, size = 0x12000, scoped, tag = 'internal scratch']
  #allocation2 [shape = 's32[1]{0}', space=sflag, size = 0x4, scoped, tag = 'scoped memory for tpu_custom_call.1']
  #allocation3 [shape = 'u8[512]{0}', space=smem, size = 0x200, scoped, tag = 'prefetched SMEM operand 0']
  #allocation4 [shape = 'u8[512]{0}', space=smem, size = 0x200, scoped, tag = 'prefetched SMEM operand 1']
  %s0 = inlined_call_operand.hbm [shape: s32[4], index: 0, kind: input, shape index: {}]
  %s1 = inlined_call_operand.vmem [shape: s32[8], index: 1, kind: input, shape index: {}]
  %s2 = inlined_call_operand.hbm [shape: f32[4,8,32], index: 2, kind: input, shape index: {}]
  %s3 = inlined_call_operand.hbm [shape: f32[4,32,32], index: 3, kind: input, shape index: {}]
  %s4 = inlined_call_operand.hbm [shape: f32[4,32,128], index: 4, kind: input, shape index: {}]
  %s5 = inlined_call_operand.vmem [shape: f32[4,1,32], index: 5, kind: input, shape index: {}]
  %s6 = inlined_call_operand.vmem [shape: f32[4,1,128], index: 6, kind: input, shape index: {}]
  %s7 = inlined_call_operand.hbm [shape: f32[2,4,8,128], index: 7, kind: output, shape index: {}]
  %s8 = sld [smem:[#allocation0]]
  $region65: #{tpu_custom_call.1} parent=0
    _
  %s10 = ssub.s32 1, %s8
  %s11 = scalar_select 0, %s10, %s8
  %13 = dma.hbm_to_smem %s0, 16, [#allocation3], [#allocation2]
  %s14 = sshll.u32 %s1, 4
  %s15 = int_to_ptr.vmem [resolvable:$true] %s14
  %17 = dma.vmem_to_smem %s15, 16, [#allocation4], [#allocation2]
  %18 = dma.done [#allocation2], 32
  %19 = sfence
  $region1: #{tpu_custom_call.1} parent=0
    #allocation5 [shape = 'u8[8192]{0}', space=vmem, size = 0x2000, scoped, tag = 'input window, operand 2']
    #allocation6 [shape = 's32[2]{0}', space=sflag, size = 0x8, scoped, tag = 'scoped memory for tpu_custom_call.1']
    #allocation7 [shape = 's32[2]{0}', space=sflag, size = 0x8, scoped, tag = 'scoped memory for tpu_custom_call.1']
    #allocation8 [shape = 'u8[32768]{0}', space=vmem, size = 0x8000, scoped, tag = 'input window, operand 3']
    #allocation9 [shape = 's32[2]{0}', space=sflag, size = 0x8, scoped, tag = 'scoped memory for tpu_custom_call.1']
    #allocation10 [shape = 'u8[32768]{0}', space=vmem, size = 0x8000, scoped, tag = 'input window, operand 4']
    #allocation11 [shape = 'u8[8192]{0}', space=vmem, size = 0x2000, scoped, tag = 'output window, operand 0']
    %20 = vsyncpa [#allocation6], 0
    %s21 = scalar_lea.sflag [#allocation6], 1
    %22 = vsyncpa %s21, 0
    %23 = vsyncpa [#allocation9], 0
    %s24 = scalar_lea.sflag [#allocation9], 1
    %25 = vsyncpa %s24, 0
    %26 = vsyncpa [#allocation7], 0
    %s27 = scalar_lea.sflag [#allocation7], 1
    %28 = vsyncpa %s27, 0
    loop: start=0, step=1, limit=10
    $region2: #{tpu_custom_call.1} parent=1 // loop_pre_header
      _
    $region3: #{tpu_custom_call.1} parent=1 // loop_header
      %s30 = sphi 0, %s34
      %p31 = scmp.ge.s32.totalorder %s30, 10
      %s37 = sphi 0, %s49
      %s38 = sphi 0, %s45
      %s39 = sphi 0, %s37
      %s40 = sphi 0, %s38
      %s41 = sphi 0, %s39
      %s42 = sphi 0, %s40
      %s58 = sphi 0, %s60
      %s61 = sphi 0, %s58
      %s62 = sphi 0, %s61
      %s78 = sphi 0, %s62
      %s86 = sphi 0, %s88
      %s89 = sphi 0, %s86
      %s90 = sphi 0, %s89
      %s106 = sphi 0, %s90
      %s114 = sphi 0, %s116
      %s117 = sphi 0, %s114
      %s118 = sphi 0, %s117
      %s134 = sphi 0, %s118
      %s138 = sphi 0, %s138
      %s140 = sphi 0, %s138
      %s141 = sphi 0, %s140
      %s155 = sphi 0, %s141
      %s159 = sphi 0, %s159
      %s161 = sphi 0, %s159
      %s162 = sphi 0, %s161
      %s176 = sphi 0, %s162
      %s190 = sphi 0, %s192
      %s193 = sphi 0, %s190
      %s194 = sphi 0, %s193
      %s210 = sphi 0, %s194
    $region4: #{tpu_custom_call.1} parent=1 // loop_header_branch
      %33 = sbr.rel (%p31) target = $region8
    $region5: #{tpu_custom_call.1} parent=1 // loop_body
      %s35 = ssub.s32 %s30, 1
      %s36 = ssub.s32 %s30, 2
      %s43 = sadd.s32 1, %s38
      %p44 = scmp.ge.s32.totalorder %s43, 2
      %s45 = scalar_select %p44, 0, %s43
      %s46 = sadd.s32 1, %s37
      %s47 = scalar_select %p44, %s46, %s37
      %p48 = scmp.ge.s32.totalorder %s47, 4
      %s49 = scalar_select %p48, 0, %s47
      %s50 = smul.u32 %s38, 4
      %s51 = sadd.s32 %s50, %s37
      %s52 = sld [smem:[#allocation4 + %s51]]
      %s53 = smul.u32 %s45, 4
      %s54 = sadd.s32 %s53, %s49
      %s55 = sld [smem:[#allocation4 + %s54]]
      %s56 = ssub.s32 %s52, %s55
      %p57 = scmp.eq.s32.totalorder %s56, 0
      %s59 = sadd.s32 %s58, 1
      %s60 = scalar_select %p57, %s58, %s59
      %p63 = pneg %p57
      %p64 = scmp.eq.s32.totalorder %s30, 7
      %p65 = por %p63, %p64
      %p66 = scmp.ne.s32.totalorder %s58, %s61
      %p67 = scmp.eq.s32.totalorder %s30, 0
      %p68 = por %p66, %p67
      %p69 = scmp.ne.s32.totalorder %s58, %s61
      %p70 = scmp.eq.s32.totalorder %s35, 7
      %p71 = por %p69, %p70
      %p72 = scmp.ne.s32.totalorder %s61, %s62
      %p73 = scmp.eq.s32.totalorder %s35, 0
      %p74 = por %p72, %p73
      %p75 = scmp.ne.s32.totalorder %s61, %s62
      %p76 = scmp.eq.s32.totalorder %s36, 7
      %p77 = por %p75, %p76
      %p79 = scmp.ne.s32.totalorder %s62, %s78
      %p80 = scmp.eq.s32.totalorder %s36, 0
      %p81 = por %p79, %p80
      %s82 = sld [smem:[#allocation3 + %s37]]
      %s83 = sld [smem:[#allocation3 + %s49]]
      %s84 = ssub.s32 %s82, %s83
      %p85 = scmp.eq.s32.totalorder %s84, 0
      %s87 = sadd.s32 %s86, 1
      %s88 = scalar_select %p85, %s86, %s87
      %p91 = pneg %p85
      %p92 = scmp.eq.s32.totalorder %s30, 7
      %p93 = por %p91, %p92
      %p94 = scmp.ne.s32.totalorder %s86, %s89
      %p95 = scmp.eq.s32.totalorder %s30, 0
      %p96 = por %p94, %p95
      %p97 = scmp.ne.s32.totalorder %s86, %s89
      %p98 = scmp.eq.s32.totalorder %s35, 7
      %p99 = por %p97, %p98
      %p100 = scmp.ne.s32.totalorder %s89, %s90
      %p101 = scmp.eq.s32.totalorder %s35, 0
      %p102 = por %p100, %p101
      %p103 = scmp.ne.s32.totalorder %s89, %s90
      %p104 = scmp.eq.s32.totalorder %s36, 7
      %p105 = por %p103, %p104
      %p107 = scmp.ne.s32.totalorder %s90, %s106
      %p108 = scmp.eq.s32.totalorder %s36, 0
      %p109 = por %p107, %p108
      %s110 = sld [smem:[#allocation3 + %s37]]
      %s111 = sld [smem:[#allocation3 + %s49]]
      %s112 = ssub.s32 %s110, %s111
      %p113 = scmp.eq.s32.totalorder %s112, 0
      %s115 = sadd.s32 %s114, 1
      %s116 = scalar_select %p113, %s114, %s115
      %p119 = pneg %p113
      %p120 = scmp.eq.s32.totalorder %s30, 7
      %p121 = por %p119, %p120
      %p122 = scmp.ne.s32.totalorder %s114, %s117
      %p123 = scmp.eq.s32.totalorder %s30, 0
      %p124 = por %p122, %p123
      %p125 = scmp.ne.s32.totalorder %s114, %s117
      %p126 = scmp.eq.s32.totalorder %s35, 7
      %p127 = por %p125, %p126
      %p128 = scmp.ne.s32.totalorder %s117, %s118
      %p129 = scmp.eq.s32.totalorder %s35, 0
      %p130 = por %p128, %p129
      %p131 = scmp.ne.s32.totalorder %s117, %s118
      %p132 = scmp.eq.s32.totalorder %s36, 7
      %p133 = por %p131, %p132
      %p135 = scmp.ne.s32.totalorder %s118, %s134
      %p136 = scmp.eq.s32.totalorder %s36, 0
      %p137 = por %p135, %p136
      %s139 = sadd.s32 %s138, 1
      %p142 = scmp.eq.s32.totalorder %s30, 7
      %p143 = scmp.ne.s32.totalorder %s138, %s140
      %p144 = scmp.eq.s32.totalorder %s30, 0
      %p145 = por %p143, %p144
      %p146 = scmp.ne.s32.totalorder %s138, %s140
      %p147 = scmp.eq.s32.totalorder %s35, 7
      %p148 = por %p146, %p147
      %p149 = scmp.ne.s32.totalorder %s140, %s141
      %p150 = scmp.eq.s32.totalorder %s35, 0
      %p151 = por %p149, %p150
      %p152 = scmp.ne.s32.totalorder %s140, %s141
      %p153 = scmp.eq.s32.totalorder %s36, 7
      %p154 = por %p152, %p153
      %p156 = scmp.ne.s32.totalorder %s141, %s155
      %p157 = scmp.eq.s32.totalorder %s36, 0
      %p158 = por %p156, %p157
      %s160 = sadd.s32 %s159, 1
      %p163 = scmp.eq.s32.totalorder %s30, 7
      %p164 = scmp.ne.s32.totalorder %s159, %s161
      %p165 = scmp.eq.s32.totalorder %s30, 0
      %p166 = por %p164, %p165
      %p167 = scmp.ne.s32.totalorder %s159, %s161
      %p168 = scmp.eq.s32.totalorder %s35, 7
      %p169 = por %p167, %p168
      %p170 = scmp.ne.s32.totalorder %s161, %s162
      %p171 = scmp.eq.s32.totalorder %s35, 0
      %p172 = por %p170, %p171
      %p173 = scmp.ne.s32.totalorder %s161, %s162
      %p174 = scmp.eq.s32.totalorder %s36, 7
      %p175 = por %p173, %p174
      %p177 = scmp.ne.s32.totalorder %s162, %s176
      %p178 = scmp.eq.s32.totalorder %s36, 0
      %p179 = por %p177, %p178
      %s180 = smul.u32 %s38, 4
      %s181 = sadd.s32 %s180, %s37
      %s182 = sld [smem:[#allocation4 + %s181]]
      %s183 = smul.u32 %s45, 4
      %s184 = sadd.s32 %s183, %s49
      %s185 = sld [smem:[#allocation4 + %s184]]
      %s186 = ssub.s32 %s38, %s45
      %s187 = ssub.s32 %s182, %s185
      %s188 = sor.u32 %s186, %s187
      %p189 = scmp.eq.s32.totalorder %s188, 0
      %s191 = sadd.s32 %s190, 1
      %s192 = scalar_select %p189, %s190, %s191
      %p195 = pneg %p189
      %p196 = scmp.eq.s32.totalorder %s30, 7
      %p197 = por %p195, %p196
      %p198 = scmp.ne.s32.totalorder %s190, %s193
      %p199 = scmp.eq.s32.totalorder %s30, 0
      %p200 = por %p198, %p199
      %p201 = scmp.ne.s32.totalorder %s190, %s193
      %p202 = scmp.eq.s32.totalorder %s35, 7
      %p203 = por %p201, %p202
      %p204 = scmp.ne.s32.totalorder %s193, %s194
      %p205 = scmp.eq.s32.totalorder %s35, 0
      %p206 = por %p204, %p205
      %p207 = scmp.ne.s32.totalorder %s193, %s194
      %p208 = scmp.eq.s32.totalorder %s36, 7
      %p209 = por %p207, %p208
      %p211 = scmp.ne.s32.totalorder %s194, %s210
      %p212 = scmp.eq.s32.totalorder %s36, 0
      %p213 = por %p211, %p212
      %p214 = scmp.le.s32.totalorder 1, %s30
      %p215 = scmp.lt.s32.totalorder %s30, 9
      %p216 = pnand %p214, %p215
      %p217 = pneg %p216
      // Predicated region
      $region9: #{tpu_custom_call.1} parent=5 // pred_check
        _
      $region10: #{tpu_custom_call.1} parent=5 // pred_check_branch
        %219 = sbr.rel (%p216) target = $region12
      $region11: #{tpu_custom_call.1} parent=5 // pred_region
        %s220 = ssub.s32 %s30, 1
        // Predicated region
        $region13: #{tpu_custom_call.1} parent=11 // pred_check
          %p221 = pneg %p151
        $region14: #{tpu_custom_call.1} parent=11 // pred_check_branch
          %223 = sbr.rel (%p221) target = $region16
        $region15: #{tpu_custom_call.1} parent=11 // pred_region
          _
        $region16: #{tpu_custom_call.1} parent=11 // pred_fallthru
          _
        // Predicated region
        $region17: #{tpu_custom_call.1} parent=11 // pred_check
          %p224 = pneg %p172
        $region18: #{tpu_custom_call.1} parent=11 // pred_check_branch
          %226 = sbr.rel (%p224) target = $region20
        $region19: #{tpu_custom_call.1} parent=11 // pred_region
          _
        $region20: #{tpu_custom_call.1} parent=11 // pred_fallthru
          _
      $region12: #{tpu_custom_call.1} parent=5 // pred_fallthru
        _
      %p227 = scmp.lt.s32.totalorder %s30, 8
      // Predicated region
      $region21: #{tpu_custom_call.1} parent=5 // pred_check
        %p228 = pneg %p227
      $region22: #{tpu_custom_call.1} parent=5 // pred_check_branch
        %230 = sbr.rel (%p228) target = $region24
      $region23: #{tpu_custom_call.1} parent=5 // pred_region
        // Predicated region
        $region25: #{tpu_custom_call.1} parent=23 // pred_check
          %p231 = pneg %p68
        $region26: #{tpu_custom_call.1} parent=23 // pred_check_branch
          %233 = sbr.rel (%p231) target = $region28
        $region27: #{tpu_custom_call.1} parent=23 // pred_region
          %s234 = sand.u32 %s58, 1
          %s235 = scalar_lea.sflag [#allocation6], %s234
          %s236 = sand.u32 %s58, 1
          %s237 = smul.addr %s236, 8
          %s238 = scalar_lea.vmem [#allocation5], %s237
          %s239 = smul.u32 %s38, 4
          %s240 = sadd.s32 %s239, %s37
          %s241 = sld [smem:[#allocation4 + %s240]]
          %s243 = ssub.s32 128, 128
          %244 = vsyncadd %s235, %s243
          %s245 = smul.addr %s241, 128
          %s246 = scalar_lea.hbm %s2, %s245
          %s248 = sshll.u32 %s238, 4
          %s249 = int_to_ptr.vmem [resolvable:$true] %s248
          %251 = dma.hbm_to_vmem [thread:$0]  %s246, 128, %s249, %s235
        $region28: #{tpu_custom_call.1} parent=23 // pred_fallthru
          _
        // Predicated region
        $region29: #{tpu_custom_call.1} parent=23 // pred_check
          %p252 = pneg %p96
        $region30: #{tpu_custom_call.1} parent=23 // pred_check_branch
          %254 = sbr.rel (%p252) target = $region32
        $region31: #{tpu_custom_call.1} parent=23 // pred_region
          %s255 = sand.u32 %s30, 1
          %s256 = scalar_lea.sflag [#allocation9], %s255
          %s257 = sand.u32 %s86, 1
          %s258 = smul.addr %s257, 32
          %s259 = scalar_lea.vmem [#allocation8], %s258
          %s260 = sld [smem:[#allocation3 + %s37]]
          %s262 = ssub.s32 512, 512
          %263 = vsyncadd %s256, %s262
          %s264 = smul.addr %s260, 4
          %s265 = smul.addr %s264, 128
          %s266 = scalar_lea.hbm %s3, %s265
          %s267 = sshll.u32 %s259, 4
          %s268 = int_to_ptr.vmem [resolvable:$true] %s267
          %273 = dma.hbm_to_vmem [thread:$0]  %s266, 512, %s268, %s256, 128, 128, 8
        $region32: #{tpu_custom_call.1} parent=23 // pred_fallthru
          _
        // Predicated region
        $region33: #{tpu_custom_call.1} parent=23 // pred_check
          %p274 = pneg %p124
        $region34: #{tpu_custom_call.1} parent=23 // pred_check_branch
          %276 = sbr.rel (%p274) target = $region36
        $region35: #{tpu_custom_call.1} parent=23 // pred_region
          %s277 = sand.u32 %s30, 1
          %s278 = scalar_lea.sflag [#allocation9], %s277
          %s279 = sand.u32 %s114, 1
          %s280 = smul.addr %s279, 32
          %s281 = scalar_lea.vmem [#allocation10], %s280
          %s282 = sld [smem:[#allocation3 + %s37]]
          %s284 = ssub.s32 512, 512
          %285 = vsyncadd %s278, %s284
          %s286 = smul.addr %s282, 4
          %s287 = smul.addr %s286, 128
          %s288 = scalar_lea.hbm %s4, %s287
          %s289 = sshll.u32 %s281, 4
          %s290 = int_to_ptr.vmem [resolvable:$true] %s289
          %295 = dma.hbm_to_vmem [thread:$0]  %s288, 512, %s290, %s278, 128, 128, 8
        $region36: #{tpu_custom_call.1} parent=23 // pred_fallthru
          _
      $region24: #{tpu_custom_call.1} parent=5 // pred_fallthru
        _
      %p296 = scmp.le.s32.totalorder 1, %s30
      %p297 = scmp.lt.s32.totalorder %s30, 9
      %p298 = pnand %p296, %p297
      %p299 = pneg %p298
      // Predicated region
      $region37: #{tpu_custom_call.1} parent=5 // pred_check
        _
      $region38: #{tpu_custom_call.1} parent=5 // pred_check_branch
        %301 = sbr.rel (%p298) target = $region40
      $region39: #{tpu_custom_call.1} parent=5 // pred_region
        %s302 = ssub.s32 %s30, 1
        %s303 = sand.u32 %s61, 1
        %s304 = scalar_lea.sflag [#allocation6], %s303
        %s305 = sand.u32 %s61, 1
        %s306 = smul.addr %s305, 8
        %s307 = scalar_lea.vmem [#allocation5], %s306
        // Predicated region
        $region41: #{tpu_custom_call.1} parent=39 // pred_check
          %p308 = pneg %p74
        $region42: #{tpu_custom_call.1} parent=39 // pred_check_branch
          %310 = sbr.rel (%p308) target = $region44
        $region43: #{tpu_custom_call.1} parent=39 // pred_region
          %311 = dma.done %s304, 128
        $region44: #{tpu_custom_call.1} parent=39 // pred_fallthru
          _
        %s312 = sand.u32 %s35, 1
        %s313 = scalar_lea.sflag [#allocation9], %s312
        %s314 = sand.u32 %s89, 1
        %s315 = smul.addr %s314, 32
        %s316 = scalar_lea.vmem [#allocation8], %s315
        // Predicated region
        $region45: #{tpu_custom_call.1} parent=39 // pred_check
          %p317 = pneg %p102
        $region46: #{tpu_custom_call.1} parent=39 // pred_check_branch
          %319 = sbr.rel (%p317) target = $region48
        $region47: #{tpu_custom_call.1} parent=39 // pred_region
          %320 = dma.done %s313, 512
        $region48: #{tpu_custom_call.1} parent=39 // pred_fallthru
          _
        %s321 = sand.u32 %s35, 1
        %s322 = scalar_lea.sflag [#allocation9], %s321
        %s323 = sand.u32 %s117, 1
        %s324 = smul.addr %s323, 32
        %s325 = scalar_lea.vmem [#allocation10], %s324
        // Predicated region
        $region49: #{tpu_custom_call.1} parent=39 // pred_check
          %p326 = pneg %p130
        $region50: #{tpu_custom_call.1} parent=39 // pred_check_branch
          %328 = sbr.rel (%p326) target = $region52
        $region51: #{tpu_custom_call.1} parent=39 // pred_region
          %329 = dma.done %s322, 512
        $region52: #{tpu_custom_call.1} parent=39 // pred_fallthru
          _
        %s330 = sand.u32 %s61, 1
        %s331 = scalar_lea.sflag [#allocation6], %s330
        %s332 = sand.u32 %s61, 1
        %s333 = smul.addr %s332, 8
        %s334 = scalar_lea.vmem [#allocation5], %s333
        %p335 = pneg %p74
        %p336 = pneg %p71
        %s337 = sand.u32 %s35, 1
        %s338 = scalar_lea.sflag [#allocation9], %s337
        %s339 = sand.u32 %s89, 1
        %s340 = smul.addr %s339, 32
        %s341 = scalar_lea.vmem [#allocation8], %s340
        %p342 = pneg %p102
        %p343 = pneg %p99
        %s344 = sand.u32 %s35, 1
        %s345 = scalar_lea.sflag [#allocation9], %s344
        %s346 = sand.u32 %s117, 1
        %s347 = smul.addr %s346, 32
        %s348 = scalar_lea.vmem [#allocation10], %s347
        %p349 = pneg %p130
        %p350 = pneg %p127
        %p351 = pneg %p151
        %p352 = pneg %p148
        %p353 = pneg %p172
        %p354 = pneg %p169
        %p355 = pneg %p206
        %p356 = pneg %p203
        %s357 = sand.u32 %s193, 1
        %s358 = scalar_lea.sflag [#allocation7], %s357
        %s359 = sand.u32 %s193, 1
        %s360 = smul.addr %s359, 8
        %s361 = scalar_lea.vmem [#allocation11], %s360
        %s362 = smul.u32 %s40, 4
        %s363 = sadd.s32 %s362, %s39
        %s364 = sld [smem:[#allocation4 + %s363]]
        %s365 = sld [smem:[#allocation3 + %s39]]
        %s366 = sld [smem:[#allocation3 + %s39]]
        %s367 = smul.u32 %s40, 4
        %s368 = sadd.s32 %s367, %s39
        %s369 = sld [smem:[#allocation4 + %s368]]
        %v370 = vld [vmem:[%s316] sm:$0xff]
        %v371 = vld [vmem:[%s316 + $0x8] sm:$0xff]
        %v372 = vld [vmem:[%s316 + $0x10] sm:$0xff]
        %v373 = vld [vmem:[%s316 + $0x18] sm:$0xff]
        %v374 = vld [vmem:[%s307] sm:$0xff]
        %s375 = scalar_lea.vmem %s5, %s39
        %v376 = vld [vmem:[%s375] sm:$0x1]
        %v378 = vlaneseq
        %v379 = vshrl.u32 %v378, 7
        %v380 = vsub.s32 0, %v379
        %v381 = vrot.slane %v376, %v380
        %vm383 = vcmask 261120
        %v385 = vsel %vm383, %v374, 0
        %387 = vmatprep.subr.mxu0 0.0
        %388 = vmatpush1.msra.mxu0 %v370
        %389 = vmatprep.subr.mxu0 0.0
        %390 = vmatpush1.msra.mxu0 %v371
        %391 = vmatprep.subr.mxu0 0.0
        %392 = vmatpush1.msra.mxu0 %v372
        %393 = vmatprep.subr.mxu0 0.0
        %394 = vmatpush1.msra.mxu0 %v373
        %395 = vmatprep.subr.mxu0 0.0
        %396 = vmatpush1.msra.mxu0 0.0
        %397 = vmatprep.subr.mxu0 0.0
        %398 = vmatpush1.msra.mxu0 0.0
        %399 = vmatprep.subr.mxu0 0.0
        %400 = vmatpush1.msra.mxu0 0.0
        %401 = vmatprep.subr.mxu0 0.0
        %402 = vmatpush1.msra.mxu0 0.0
        %403 = vmatprep.subr.mxu0 0.0
        %404 = vmatpush1.msra.mxu0 0.0
        %405 = vmatprep.subr.mxu0 0.0
        %406 = vmatpush1.msra.mxu0 0.0
        %407 = vmatprep.subr.mxu0 0.0
        %408 = vmatpush1.msra.mxu0 0.0
        %409 = vmatprep.subr.mxu0 0.0
        %410 = vmatpush1.msra.mxu0 0.0
        %411 = vmatprep.subr.mxu0 0.0
        %412 = vmatpush1.msra.mxu0 0.0
        %413 = vmatprep.subr.mxu0 0.0
        %414 = vmatpush1.msra.mxu0 0.0
        %415 = vmatprep.subr.mxu0 0.0
        %416 = vmatpush1.msra.mxu0 0.0
        %417 = vmatprep.subr.mxu0 0.0
        %418 = vmatpush1.msra.mxu0 0.0
        %419 = vmatprep.subr.mxu0 0.0
        %420 = vmatpush1.msra.mxu0 0.0
        %421 = vmatprep.subr.mxu0 0.0
        %422 = vmatpush1.msra.mxu0 0.0
        %423 = vmatprep.subr.mxu0 0.0
        %424 = vmatpush1.msra.mxu0 0.0
        %425 = vmatprep.subr.mxu0 0.0
        %426 = vmatpush1.msra.mxu0 0.0
        %427 = vmatprep.subr.mxu0 0.0
        %428 = vmatpush1.msra.mxu0 0.0
        %429 = vmatprep.subr.mxu0 0.0
        %430 = vmatpush1.msra.mxu0 0.0
        %431 = vmatprep.subr.mxu0 0.0
        %432 = vmatpush1.msra.mxu0 0.0
        %433 = vmatprep.subr.mxu0 0.0
        %434 = vmatpush1.msra.mxu0 0.0
        %435 = vmatprep.subr.mxu0 0.0
        %436 = vmatpush1.msra.mxu0 0.0
        %437 = vmatprep.subr.mxu0 0.0
        %438 = vmatpush1.msra.mxu0 0.0
        %439 = vmatprep.subr.mxu0 0.0
        %440 = vmatpush1.msra.mxu0 0.0
        %441 = vmatprep.subr.mxu0 0.0
        %442 = vmatpush1.msra.mxu0 0.0
        %443 = vmatprep.subr.mxu0 0.0
        %444 = vmatpush1.msra.mxu0 0.0
        %445 = vmatprep.subr.mxu0 0.0
        %446 = vmatpush1.msra.mxu0 0.0
        %447 = vmatprep.subr.mxu0 0.0
        %448 = vmatpush1.msra.mxu0 0.0
        %449 = vmatprep.subr.mxu0 0.0
        %450 = vmatpush1.msra.mxu0 0.0
        %451 = vmatprep.mubr.f32.mxu0 0.0
        %452 = vmatmul.mubr.f32.gmra.mrb[0].mxu0 %v385
        %v453 = vpop.f32.mrb[0].mxu0
        %v454 = vadd.f32 %v381, %v453
        %v455 = vpop.f32.mrb[0].mxu0
        %456 = vdwg.mxu0
        %v457 = vmax.f32 %v454, 0.0
        %v458 = vld [vmem:[%s325] sm:$0xff]
        %v459 = vld [vmem:[%s325 + $0x8] sm:$0xff]
        %v460 = vld [vmem:[%s325 + $0x10] sm:$0xff]
        %v461 = vld [vmem:[%s325 + $0x18] sm:$0xff]
        %s462 = scalar_lea.vmem %s6, %s39
        %v463 = vld [vmem:[%s462] sm:$0x1]
        %v465 = vlaneseq
        %v466 = vshrl.u32 %v465, 7
        %v467 = vsub.s32 0, %v466
        %v468 = vrot.slane %v463, %v467
        %v471 = vsel %vm383, %v457, 0
        %473 = vmatprep.subr.mxu0 0.0
        %474 = vmatpush1.msra.mxu0 %v458
        %475 = vmatprep.subr.mxu0 0.0
        %476 = vmatpush1.msra.mxu0 %v459
        %477 = vmatprep.subr.mxu0 0.0
        %478 = vmatpush1.msra.mxu0 %v460
        %479 = vmatprep.subr.mxu0 0.0
        %480 = vmatpush1.msra.mxu0 %v461
        %481 = vmatprep.subr.mxu0 0.0
        %482 = vmatpush1.msra.mxu0 0.0
        %483 = vmatprep.subr.mxu0 0.0
        %484 = vmatpush1.msra.mxu0 0.0
        %485 = vmatprep.subr.mxu0 0.0
        %486 = vmatpush1.msra.mxu0 0.0
        %487 = vmatprep.subr.mxu0 0.0
        %488 = vmatpush1.msra.mxu0 0.0
        %489 = vmatprep.subr.mxu0 0.0
        %490 = vmatpush1.msra.mxu0 0.0
        %491 = vmatprep.subr.mxu0 0.0
        %492 = vmatpush1.msra.mxu0 0.0
        %493 = vmatprep.subr.mxu0 0.0
        %494 = vmatpush1.msra.mxu0 0.0
        %495 = vmatprep.subr.mxu0 0.0
        %496 = vmatpush1.msra.mxu0 0.0
        %497 = vmatprep.subr.mxu0 0.0
        %498 = vmatpush1.msra.mxu0 0.0
        %499 = vmatprep.subr.mxu0 0.0
        %500 = vmatpush1.msra.mxu0 0.0
        %501 = vmatprep.subr.mxu0 0.0
        %502 = vmatpush1.msra.mxu0 0.0
        %503 = vmatprep.subr.mxu0 0.0
        %504 = vmatpush1.msra.mxu0 0.0
        %505 = vmatprep.subr.mxu0 0.0
        %506 = vmatpush1.msra.mxu0 0.0
        %507 = vmatprep.subr.mxu0 0.0
        %508 = vmatpush1.msra.mxu0 0.0
        %509 = vmatprep.subr.mxu0 0.0
        %510 = vmatpush1.msra.mxu0 0.0
        %511 = vmatprep.subr.mxu0 0.0
        %512 = vmatpush1.msra.mxu0 0.0
        %513 = vmatprep.subr.mxu0 0.0
        %514 = vmatpush1.msra.mxu0 0.0
        %515 = vmatprep.subr.mxu0 0.0
        %516 = vmatpush1.msra.mxu0 0.0
        %517 = vmatprep.subr.mxu0 0.0
        %518 = vmatpush1.msra.mxu0 0.0
        %519 = vmatprep.subr.mxu0 0.0
        %520 = vmatpush1.msra.mxu0 0.0
        %521 = vmatprep.subr.mxu0 0.0
        %522 = vmatpush1.msra.mxu0 0.0
        %523 = vmatprep.subr.mxu0 0.0
        %524 = vmatpush1.msra.mxu0 0.0
        %525 = vmatprep.subr.mxu0 0.0
        %526 = vmatpush1.msra.mxu0 0.0
        %527 = vmatprep.subr.mxu0 0.0
        %528 = vmatpush1.msra.mxu0 0.0
        %529 = vmatprep.subr.mxu0 0.0
        %530 = vmatpush1.msra.mxu0 0.0
        %531 = vmatprep.subr.mxu0 0.0
        %532 = vmatpush1.msra.mxu0 0.0
        %533 = vmatprep.subr.mxu0 0.0
        %534 = vmatpush1.msra.mxu0 0.0
        %535 = vmatprep.subr.mxu0 0.0
        %536 = vmatpush1.msra.mxu0 0.0
        %537 = vmatprep.mubr.f32.mxu0 0.0
        %538 = vmatmul.mubr.f32.gmra.mrb[0].mxu0 %v471
        %v539 = vpop.f32.mrb[0].mxu0
        %v540 = vadd.f32 %v468, %v539
        %v541 = vpop.f32.mrb[0].mxu0
        %542 = vdwg.mxu0
        %543 = vst [vmem:[%s361] sm:$0xff] %v540
        %s544 = sand.u32 %s193, 1
        %s545 = scalar_lea.sflag [#allocation7], %s544
        %s546 = sand.u32 %s193, 1
        %s547 = smul.addr %s546, 8
        %s548 = scalar_lea.vmem [#allocation11], %s547
        // Predicated region
        $region53: #{tpu_custom_call.1} parent=39 // pred_check
          %p549 = pneg %p203
        $region54: #{tpu_custom_call.1} parent=39 // pred_check_branch
          %551 = sbr.rel (%p549) target = $region56
        $region55: #{tpu_custom_call.1} parent=39 // pred_region
          %s552 = smul.u32 %s40, 4
          %s553 = sadd.s32 %s552, %s39
          %s554 = sld [smem:[#allocation4 + %s553]]
          %s556 = ssub.s32 128, 128
          %557 = vsyncadd %s545, %s556
          %s558 = smul.addr %s40, 4
          %s559 = sadd.s32 %s554, %s558
          %s560 = smul.addr %s559, 128
          %s561 = scalar_lea.hbm %s7, %s560
          %s563 = sshll.u32 %s548, 4
          %s564 = int_to_ptr.vmem [resolvable:$true] %s563
          %566 = dma.vmem_to_hbm [thread:$0]  %s564, 128, %s561, %s545
        $region56: #{tpu_custom_call.1} parent=39 // pred_fallthru
          _
      $region40: #{tpu_custom_call.1} parent=5 // pred_fallthru
        _
      %p567 = scmp.le.s32.totalorder 2, %s30
      // Predicated region
      $region57: #{tpu_custom_call.1} parent=5 // pred_check
        %p568 = pneg %p567
      $region58: #{tpu_custom_call.1} parent=5 // pred_check_branch
        %570 = sbr.rel (%p568) target = $region60
      $region59: #{tpu_custom_call.1} parent=5 // pred_region
        %s571 = ssub.s32 %s30, 2
        // Predicated region
        $region61: #{tpu_custom_call.1} parent=59 // pred_check
          %p572 = pneg %p209
        $region62: #{tpu_custom_call.1} parent=59 // pred_check_branch
          %574 = sbr.rel (%p572) target = $region64
        $region63: #{tpu_custom_call.1} parent=59 // pred_region
          %s575 = sand.u32 %s194, 1
          %s576 = scalar_lea.sflag [#allocation7], %s575
          %s577 = sand.u32 %s194, 1
          %s578 = smul.addr %s577, 8
          %s579 = scalar_lea.vmem [#allocation11], %s578
          %580 = dma.done %s576, 128
        $region64: #{tpu_custom_call.1} parent=59 // pred_fallthru
          _
      $region60: #{tpu_custom_call.1} parent=5 // pred_fallthru
        _
    $region6: #{tpu_custom_call.1} parent=1 // loop_footer
      %s34 = sadd.s32 1, %s30
    $region7: #{tpu_custom_call.1} parent=1 // loop_footer_branch
      %29 = sbr.rel target = $region3
    $region8: #{tpu_custom_call.1} parent=1 // loop_exit
      _
    %581 = vsyncpa [#allocation6], 1
    %s582 = scalar_lea.sflag [#allocation6], 1
    %583 = vsyncpa %s582, 1
    %584 = vsyncpa [#allocation9], 1
    %s585 = scalar_lea.sflag [#allocation9], 1
    %586 = vsyncpa %s585, 1
    %587 = vsyncpa [#allocation7], 1
    %s588 = scalar_lea.sflag [#allocation7], 1
    %589 = vsyncpa %s588, 1

</llo_original>
